<compile_context>
chip_gen: v5e
topology: v5e:2x2
jax: 0.10.0
libtpu: 0.0.40
codegen_flags: <defaults>
</compile_context>

<pallas_src>
import functools
from typing import NamedTuple, Optional

import jax
import jax.numpy as jnp
from jax.experimental import pallas as pl
from jax.experimental.pallas import tpu as pltpu


class Batch(NamedTuple):
    x: jax.Array
    mu: jax.Array
    logstd: jax.Array


_VMEM_LIMIT = 32 * 1024 * 1024       # safe scoped VMEM ceiling on all gens
_TILE_BYTES_CAP = 2 * 1024 * 1024    # max bytes per tile per buffer
_TILE_BYTES_MIN = 512 * 1024         # don't shrink below (per-step overhead)
_TARGET_GRID_STEPS = 4               # >= 2 pipelined steps per v7x TC


def _round_up(x: int, m: int) -> int:
    return ((x + m - 1) // m) * m


def _sublane(dtype) -> int:
    # Sublane packing: 8 rows for 4-byte, 16 for 2-byte, 32 for 1-byte dtypes.
    return max(8, 32 // jnp.dtype(dtype).itemsize)


def _plan_rows(n_rows: int, n_cols: int, dtype):
    """Pick (tile_rows, grid) for a (n_rows, n_cols) elementwise kernel."""
    sub = _sublane(dtype)
    row_bytes = n_cols * jnp.dtype(dtype).itemsize
    max_rows = max(sub, (_TILE_BYTES_CAP // row_bytes) // sub * sub)
    min_rows = _round_up(max(1, pl.cdiv(_TILE_BYTES_MIN, row_bytes)), sub)

    tile = _round_up(pl.cdiv(n_rows, _TARGET_GRID_STEPS), sub)
    tile = max(tile, min_rows)   # don't make tiles so small overhead dominates
    tile = min(tile, max_rows)   # VMEM cap wins
    if tile >= n_rows:
        return n_rows, 1         # single block; full dims are always legal
    return tile, pl.cdiv(n_rows, tile)


def _reparam_train_kernel(mu_ref, logstd_ref, noise_ref, *out_refs,
                          max_logstd: Optional[float]):
    """x = mu + noise * exp(clamp(logstd)); optionally emits clamped logstd."""
    mu = mu_ref[...].astype(jnp.float32)
    logstd = logstd_ref[...].astype(jnp.float32)
    if max_logstd is not None:
        logstd = jnp.minimum(logstd, jnp.float32(max_logstd))
    noise = noise_ref[...].astype(jnp.float32)

    x_ref = out_refs[0]
    x_ref[...] = (mu + noise * jnp.exp(logstd)).astype(x_ref.dtype)
    if max_logstd is not None:
        ls_ref = out_refs[1]
        ls_ref[...] = logstd.astype(ls_ref.dtype)


class VGAEReparametrization:
    """JAX/Pallas port of VGAE_Reparametrization."""

    def __init__(self, MAX_LOGSTD=None, num_noise_samples=100):
        self.MAX_LOGSTD = MAX_LOGSTD
        self.num_noise_samples = num_noise_samples  # unused in forward (as in torch)
        self.training = True

    # ---- training-mode pallas_call -----------------------------------------

    def _run_train(self, mu, logstd, noise):
        shape, dtype = mu.shape, mu.dtype
        n_cols = shape[-1] if mu.ndim > 1 else mu.size
        n_rows = mu.size // n_cols
        mu2 = mu.reshape(n_rows, n_cols)       # no-op for 2-D inputs
        ls2 = logstd.reshape(n_rows, n_cols)
        nz2 = noise.reshape(n_rows, n_cols)

        tile_rows, grid = _plan_rows(n_rows, n_cols, dtype)
        spec = pl.BlockSpec((tile_rows, n_cols), lambda i: (i, 0))

        clamp = self.MAX_LOGSTD is not None
        x_sds = jax.ShapeDtypeStruct((n_rows, n_cols), dtype)
        ls_sds = jax.ShapeDtypeStruct((n_rows, n_cols), logstd.dtype)
        out_shape = (x_sds, ls_sds) if clamp else (x_sds,)
        n_out = len(out_shape)

        out = pl.pallas_call(
            functools.partial(_reparam_train_kernel,
                              max_logstd=self.MAX_LOGSTD),
            out_shape=out_shape,
            grid=(grid,),
            in_specs=[spec, spec, spec],
            out_specs=tuple([spec] * n_out),
            input_output_aliases={2: 0},   # donate noise temporary to x
            compiler_params=pltpu.CompilerParams(
                dimension_semantics=("parallel",),
                vmem_limit_bytes=_VMEM_LIMIT,
            ),
        )(mu2, ls2, nz2)

        x = out[0].reshape(shape)
        logstd_out = out[1].reshape(shape) if clamp else logstd
        return x, logstd_out

    # ---- forward -------------------------------------------------------------

    def __call__(self, mu_logstd, *, rng_key=None):
        mu_batch, logstd_batch = mu_logstd
        mu, logstd = mu_batch.x, logstd_batch.x
        assert mu.shape == logstd.shape and mu.dtype == logstd.dtype

        if self.training:
            assert rng_key is not None, "rng_key required in training mode"
            noise = jax.random.normal(rng_key, mu.shape, dtype=mu.dtype)
            x, logstd_out = self._run_train(mu, logstd, noise)
        else:
            x = mu  # same array, no copy (matches torch semantics / perf)
            # Plain fused clamp — strictly cheaper than a Pallas dispatch here.
            logstd_out = (jnp.minimum(logstd, self.MAX_LOGSTD)
                          if self.MAX_LOGSTD is not None else logstd)

        # new_batch = copy of mu_batch with updated (x, mu, logstd)
        return mu_batch._replace(x=x, mu=mu, logstd=logstd_out)


def _ref_train(mu, logstd, noise, max_logstd):
    ls = logstd.astype(jnp.float32)
    if max_logstd is not None:
        ls = jnp.minimum(ls, jnp.float32(max_logstd))
    x = (mu.astype(jnp.float32)
         + noise.astype(jnp.float32) * jnp.exp(ls)).astype(mu.dtype)
    return x, ls.astype(logstd.dtype)


if __name__ == "__main__":
    key = jax.random.PRNGKey(0)
    k_mu, k_ls, k_noise = jax.random.split(key, 3)

    # --- small graph: 64 nodes, 32-dim latent (training + clamp) --------------
    N, D = 64, 32
    mu = jax.random.normal(k_mu, (N, D), dtype=jnp.float32)
    logstd = jax.random.normal(k_ls, (N, D), dtype=jnp.float32) - 1.0
    mu_batch = Batch(x=mu, mu=mu, logstd=logstd)
    logstd_batch = Batch(x=logstd, mu=mu, logstd=logstd)

    MAX_LOGSTD = 0.5
    module = VGAEReparametrization(MAX_LOGSTD=MAX_LOGSTD, num_noise_samples=100)
    module.training = True
    out = module((mu_batch, logstd_batch), rng_key=k_noise)
    jax.block_until_ready(out.x)

    noise_ref = jax.random.normal(k_noise, (N, D), dtype=jnp.float32)
    ref_x, ref_ls = _ref_train(mu, logstd, noise_ref, MAX_LOGSTD)
    assert out.x.shape == mu.shape and out.x.dtype == mu.dtype
    assert jnp.allclose(out.x, ref_x, atol=1e-5, rtol=1e-5)
    assert jnp.allclose(out.logstd, ref_ls, atol=1e-6)
    assert jnp.array_equal(out.mu, mu)
    # deterministic for a fixed key
    out2 = module((mu_batch, logstd_batch), rng_key=k_noise)
    assert jnp.array_equal(out.x, out2.x)

    # --- training, no clamp (single-output kernel path) -----------------------
    module_nc = VGAEReparametrization(MAX_LOGSTD=None)
    module_nc.training = True
    out_nc = module_nc((mu_batch, logstd_batch), rng_key=k_noise)
    jax.block_until_ready(out_nc.x)
    ref_x_nc, _ = _ref_train(mu, logstd, noise_ref, None)
    assert out_nc.logstd is logstd  # pure passthrough, no copy
    assert jnp.allclose(out_nc.x, ref_x_nc, atol=1e-5, rtol=1e-5)

    # --- eval: x is mu (no kernel), logstd clamped by fused jnp.minimum -------
    module.training = False
    out_eval = module((mu_batch, logstd_batch))
    jax.block_until_ready(out_eval.logstd)
    assert out_eval.x is mu
    assert jnp.allclose(out_eval.logstd, ref_ls, atol=1e-6)

    # --- larger f32 input: multi-step parallel grid + ragged last row block ---
    module.training = True
    N2, D2 = 4100, 128   # tile_rows=1032, grid=4, partial last block
    mu2 = jax.random.normal(jax.random.PRNGKey(1), (N2, D2), dtype=jnp.float32)
    ls2 = jax.random.normal(jax.random.PRNGKey(2), (N2, D2),
                            dtype=jnp.float32) - 1.0
    k2 = jax.random.PRNGKey(3)
    out_big = module((Batch(mu2, mu2, ls2), Batch(ls2, mu2, ls2)), rng_key=k2)
    jax.block_until_ready(out_big.x)
    nz2 = jax.random.normal(k2, (N2, D2), dtype=jnp.float32)
    ref_x2, ref_ls2 = _ref_train(mu2, ls2, nz2, MAX_LOGSTD)
    assert jnp.allclose(out_big.x, ref_x2, atol=1e-5, rtol=1e-5)
    assert jnp.allclose(out_big.logstd, ref_ls2, atol=1e-6)

    # --- bf16 input: exercises 16-row sublane rounding + edge-masked block ----
    N3, D3 = 2080, 128   # tile_rows=2048 (multiple of 16), grid=2
    mu3 = jax.random.normal(jax.random.PRNGKey(4), (N3, D3), dtype=jnp.bfloat16)
    ls3 = (jax.random.normal(jax.random.PRNGKey(5), (N3, D3),
                             dtype=jnp.bfloat16) - 1.0).astype(jnp.bfloat16)
    k3 = jax.random.PRNGKey(6)
    out_bf = module((Batch(mu3, mu3, ls3), Batch(ls3, mu3, ls3)), rng_key=k3)
    jax.block_until_ready(out_bf.x)
    nz3 = jax.random.normal(k3, (N3, D3), dtype=jnp.bfloat16)
    ref_x3, ref_ls3 = _ref_train(mu3, ls3, nz3, MAX_LOGSTD)
    assert out_bf.x.dtype == jnp.bfloat16
    assert jnp.allclose(out_bf.x.astype(jnp.float32),
                        ref_x3.astype(jnp.float32), atol=2e-2, rtol=2e-2)
    assert jnp.allclose(out_bf.logstd.astype(jnp.float32),
                        ref_ls3.astype(jnp.float32), atol=1e-2)

    print("KERNEL_OK")
</pallas_src>

<mosaic_0001>
module attributes {stable_mosaic.version = 11 : i64} {
  func.func @_reparam_train_kernel(%arg0: i32, %arg1: memref<64x32xf32, #tpu.memory_space<vmem>>, %arg2: memref<64x32xf32, #tpu.memory_space<vmem>>, %arg3: memref<64x32xf32, #tpu.memory_space<vmem>>, %arg4: memref<64x32xf32, #tpu.memory_space<vmem>>, %arg5: memref<64x32xf32, #tpu.memory_space<vmem>>) attributes {dimension_semantics = [#tpu.dimension_semantics<parallel>], iteration_bounds = array<i64: 1>, scalar_prefetch = 0 : i64, scratch_operands = 0 : i64, tpu.core_type = #tpu.core_type<tc>, window_params = [{transform_indices = @transform_0, window_bounds = array<i64: 64, 32>}, {transform_indices = @transform_1, window_bounds = array<i64: 64, 32>}, {transform_indices = @transform_2, window_bounds = array<i64: 64, 32>}, {transform_indices = @transform_3, window_bounds = array<i64: 64, 32>}, {transform_indices = @transform_4, window_bounds = array<i64: 64, 32>}]} {
    %c0 = arith.constant 0 : index
    %c0_0 = arith.constant 0 : index
    %0 = vector.load %arg1[%c0, %c0_0] : memref<64x32xf32, #tpu.memory_space<vmem>>, vector<64x32xf32>
    %c0_1 = arith.constant 0 : index
    %c0_2 = arith.constant 0 : index
    %1 = vector.load %arg2[%c0_1, %c0_2] : memref<64x32xf32, #tpu.memory_space<vmem>>, vector<64x32xf32>
    %cst = arith.constant 5.000000e-01 : f32
    %2 = vector.broadcast %cst : f32 to vector<64x32xf32>
    %3 = arith.minimumf %1, %2 : vector<64x32xf32>
    %c0_3 = arith.constant 0 : index
    %c0_4 = arith.constant 0 : index
    %4 = vector.load %arg3[%c0_3, %c0_4] : memref<64x32xf32, #tpu.memory_space<vmem>>, vector<64x32xf32>
    %5 = math.exp %3 : vector<64x32xf32>
    %6 = arith.mulf %4, %5 : vector<64x32xf32>
    %7 = arith.addf %0, %6 : vector<64x32xf32>
    %c0_5 = arith.constant 0 : index
    %c0_6 = arith.constant 0 : index
    %8 = vector.load %arg4[%c0_5, %c0_6] : memref<64x32xf32, #tpu.memory_space<vmem>>, vector<64x32xf32>
    tpu.vector_store %arg4[%c0_5, %c0_6], %7 {strides = array<i32>} : memref<64x32xf32, #tpu.memory_space<vmem>>, vector<64x32xf32>,
    %c0_7 = arith.constant 0 : index
    %c0_8 = arith.constant 0 : index
    %9 = vector.load %arg5[%c0_7, %c0_8] : memref<64x32xf32, #tpu.memory_space<vmem>>, vector<64x32xf32>
    tpu.vector_store %arg5[%c0_7, %c0_8], %3 {strides = array<i32>} : memref<64x32xf32, #tpu.memory_space<vmem>>, vector<64x32xf32>,
    return
  }
  func.func @transform_0(%arg0: i32) -> (i32, i32) {
    %c0_i32 = arith.constant 0 : i32
    %c0_i32_0 = arith.constant 0 : i32
    return %arg0, %c0_i32 : i32, i32
  }
  func.func @transform_1(%arg0: i32) -> (i32, i32) {
    %c0_i32 = arith.constant 0 : i32
    %c0_i32_0 = arith.constant 0 : i32
    return %arg0, %c0_i32 : i32, i32
  }
  func.func @transform_2(%arg0: i32) -> (i32, i32) {
    %c0_i32 = arith.constant 0 : i32
    %c0_i32_0 = arith.constant 0 : i32
    return %arg0, %c0_i32 : i32, i32
  }
  func.func @transform_3(%arg0: i32) -> (i32, i32) {
    %c0_i32 = arith.constant 0 : i32
    %c0_i32_0 = arith.constant 0 : i32
    return %arg0, %c0_i32 : i32, i32
  }
  func.func @transform_4(%arg0: i32) -> (i32, i32) {
    %c0_i32 = arith.constant 0 : i32
    %c0_i32_0 = arith.constant 0 : i32
    return %arg0, %c0_i32 : i32, i32
  }
}

</mosaic_0001>

<llo_original>
// kernel: tpu_custom_call.1
$region0: #{tpu_custom_call.1}
  #allocation0 [shape = 'u32[]', space=smem, size = 0x4, offset = 0x4, fixed_abs, tag = 'smem constant byte address 0x4 - core index']
  #allocation1 [shape = 'u32[72,128]{1,0:T(1,128)}', space=vmem, size = 0x9000, scoped, tag = 'internal scratch']
  %s0 = inlined_call_operand.vmem [shape: f32[64,32], index: 0, kind: input, shape index: {}]
  %s1 = inlined_call_operand.vmem [shape: f32[64,32], index: 1, kind: input, shape index: {}]
  %s2 = inlined_call_operand.vmem [shape: f32[64,32], index: 2, kind: input, shape index: {}, may-alias: {2,3}]
  %s3 = inlined_call_operand.vmem [shape: f32[64,32], index: 3, kind: output, shape index: {0}, may-alias: {2,3}]
  %s4 = inlined_call_operand.vmem [shape: f32[64,32], index: 4, kind: output, shape index: {1}]
  %5 = xla_tuple %s3, %s4
  %s6 = sld [smem:[#allocation0]]
  $region30: #{tpu_custom_call.1} parent=0
    _
  %s8 = ssub.s32 1, %s6
  %s9 = scalar_select 0, %s8, %s6
  // Predicated region
  $region2: #{tpu_custom_call.1} parent=0 // pred_check
    _
  $region3: #{tpu_custom_call.1} parent=0 // pred_check_branch
    %11 = sbr.rel (0) target = $region5
  $region4: #{tpu_custom_call.1} parent=0 // pred_region
    _
  $region5: #{tpu_custom_call.1} parent=0 // pred_fallthru
    _
  // Predicated region
  $region6: #{tpu_custom_call.1} parent=0 // pred_check
    _
  $region7: #{tpu_custom_call.1} parent=0 // pred_check_branch
    %13 = sbr.rel (0) target = $region9
  $region8: #{tpu_custom_call.1} parent=0 // pred_region
    _
  $region9: #{tpu_custom_call.1} parent=0 // pred_fallthru
    _
  // Predicated region
  $region10: #{tpu_custom_call.1} parent=0 // pred_check
    _
  $region11: #{tpu_custom_call.1} parent=0 // pred_check_branch
    %15 = sbr.rel (0) target = $region13
  $region12: #{tpu_custom_call.1} parent=0 // pred_region
    _
  $region13: #{tpu_custom_call.1} parent=0 // pred_fallthru
    _
  %v16 = vld [vmem:[%s0] sm:$0xff]
  %v17 = vld [vmem:[%s0 + $0x8] sm:$0xff]
  %v18 = vld [vmem:[%s0 + $0x10] sm:$0xff]
  %v19 = vld [vmem:[%s0 + $0x18] sm:$0xff]
  %v20 = vld [vmem:[%s0 + $0x20] sm:$0xff]
  %v21 = vld [vmem:[%s0 + $0x28] sm:$0xff]
  %v22 = vld [vmem:[%s0 + $0x30] sm:$0xff]
  %v23 = vld [vmem:[%s0 + $0x38] sm:$0xff]
  %v24 = vld [vmem:[%s1] sm:$0xff]
  %v25 = vld [vmem:[%s1 + $0x8] sm:$0xff]
  %v26 = vld [vmem:[%s1 + $0x10] sm:$0xff]
  %v27 = vld [vmem:[%s1 + $0x18] sm:$0xff]
  %v28 = vld [vmem:[%s1 + $0x20] sm:$0xff]
  %v29 = vld [vmem:[%s1 + $0x28] sm:$0xff]
  %v30 = vld [vmem:[%s1 + $0x30] sm:$0xff]
  %v31 = vld [vmem:[%s1 + $0x38] sm:$0xff]
  %v32 = vmin.f32 %v24, 0.5
  %v33 = vmin.f32 %v25, 0.5
  %v34 = vmin.f32 %v26, 0.5
  %v35 = vmin.f32 %v27, 0.5
  %v36 = vmin.f32 %v28, 0.5
  %v37 = vmin.f32 %v29, 0.5
  %v38 = vmin.f32 %v30, 0.5
  %v39 = vmin.f32 %v31, 0.5
  %v40 = vld [vmem:[%s2] sm:$0xff]
  %v41 = vld [vmem:[%s2 + $0x8] sm:$0xff]
  %v42 = vld [vmem:[%s2 + $0x10] sm:$0xff]
  %v43 = vld [vmem:[%s2 + $0x18] sm:$0xff]
  %v44 = vld [vmem:[%s2 + $0x20] sm:$0xff]
  %v45 = vld [vmem:[%s2 + $0x28] sm:$0xff]
  %v46 = vld [vmem:[%s2 + $0x30] sm:$0xff]
  %v47 = vld [vmem:[%s2 + $0x38] sm:$0xff]
  %v48 = vmul.f32 %v32, 1.442695
  %v49 = vpow.pop %v48
  %v50 = vmul.f32 %v33, 1.442695
  %v51 = vpow.pop %v50
  %v52 = vmul.f32 %v34, 1.442695
  %v53 = vpow.pop %v52
  %v54 = vmul.f32 %v35, 1.442695
  %v55 = vpow.pop %v54
  %v56 = vmul.f32 %v36, 1.442695
  %v57 = vpow.pop %v56
  %v58 = vmul.f32 %v37, 1.442695
  %v59 = vpow.pop %v58
  %v60 = vmul.f32 %v38, 1.442695
  %v61 = vpow.pop %v60
  %v62 = vmul.f32 %v39, 1.442695
  %v63 = vpow.pop %v62
  %v64 = vmul.f32 %v40, %v49
  %v65 = vmul.f32 %v41, %v51
  %v66 = vmul.f32 %v42, %v53
  %v67 = vmul.f32 %v43, %v55
  %v68 = vmul.f32 %v44, %v57
  %v69 = vmul.f32 %v45, %v59
  %v70 = vmul.f32 %v46, %v61
  %v71 = vmul.f32 %v47, %v63
  %v72 = vadd.f32 %v16, %v64
  %v73 = vadd.f32 %v17, %v65
  %v74 = vadd.f32 %v18, %v66
  %v75 = vadd.f32 %v19, %v67
  %v76 = vadd.f32 %v20, %v68
  %v77 = vadd.f32 %v21, %v69
  %v78 = vadd.f32 %v22, %v70
  %v79 = vadd.f32 %v23, %v71
  %vm80 = vcmask 261120
  %81 = vst.msk [vmem:[%s3] sm:$0xff] %vm80, %v72
  %82 = vst.msk [vmem:[%s3 + $0x8] sm:$0xff] %vm80, %v73
  %83 = vst.msk [vmem:[%s3 + $0x10] sm:$0xff] %vm80, %v74
  %84 = vst.msk [vmem:[%s3 + $0x18] sm:$0xff] %vm80, %v75
  %85 = vst.msk [vmem:[%s3 + $0x20] sm:$0xff] %vm80, %v76
  %86 = vst.msk [vmem:[%s3 + $0x28] sm:$0xff] %vm80, %v77
  %87 = vst.msk [vmem:[%s3 + $0x30] sm:$0xff] %vm80, %v78
  %88 = vst.msk [vmem:[%s3 + $0x38] sm:$0xff] %vm80, %v79
  %89 = vst.msk [vmem:[%s4] sm:$0xff] %vm80, %v32
  %90 = vst.msk [vmem:[%s4 + $0x8] sm:$0xff] %vm80, %v33
  %91 = vst.msk [vmem:[%s4 + $0x10] sm:$0xff] %vm80, %v34
  %92 = vst.msk [vmem:[%s4 + $0x18] sm:$0xff] %vm80, %v35
  %93 = vst.msk [vmem:[%s4 + $0x20] sm:$0xff] %vm80, %v36
  %94 = vst.msk [vmem:[%s4 + $0x28] sm:$0xff] %vm80, %v37
  %95 = vst.msk [vmem:[%s4 + $0x30] sm:$0xff] %vm80, %v38
  %96 = vst.msk [vmem:[%s4 + $0x38] sm:$0xff] %vm80, %v39
  // Predicated region
  $region14: #{tpu_custom_call.1} parent=0 // pred_check
    _
  $region15: #{tpu_custom_call.1} parent=0 // pred_check_branch
    %98 = sbr.rel (0) target = $region17
  $region16: #{tpu_custom_call.1} parent=0 // pred_region
    _
  $region17: #{tpu_custom_call.1} parent=0 // pred_fallthru
    _
  // Predicated region
  $region18: #{tpu_custom_call.1} parent=0 // pred_check
    _
  $region19: #{tpu_custom_call.1} parent=0 // pred_check_branch
    %100 = sbr.rel (0) target = $region21
  $region20: #{tpu_custom_call.1} parent=0 // pred_region
    _
  $region21: #{tpu_custom_call.1} parent=0 // pred_fallthru
    _
  // Predicated region
  $region22: #{tpu_custom_call.1} parent=0 // pred_check
    _
  $region23: #{tpu_custom_call.1} parent=0 // pred_check_branch
    %102 = sbr.rel (0) target = $region25
  $region24: #{tpu_custom_call.1} parent=0 // pred_region
    _
  $region25: #{tpu_custom_call.1} parent=0 // pred_fallthru
    _
  // Predicated region
  $region26: #{tpu_custom_call.1} parent=0 // pred_check
    _
  $region27: #{tpu_custom_call.1} parent=0 // pred_check_branch
    %104 = sbr.rel (0) target = $region29
  $region28: #{tpu_custom_call.1} parent=0 // pred_region
    _
  $region29: #{tpu_custom_call.1} parent=0 // pred_fallthru
    _

</llo_original>
